<compile_context>
chip_gen: v6e
topology: v6e:2x2x1
jax: 0.10.0
libtpu: 0.0.40
codegen_flags: <defaults>
</compile_context>

<pallas_src>
import functools

import jax
import jax.numpy as jnp
from jax.experimental import pallas as pl
from jax.experimental.pallas import tpu as pltpu

_LANE = 128


def _nce_kernel(x_ref, o_ref, m_ref, l_ref, t_ref, *, B, C, bb, bc):
    """One (batch-tile, class-tile) grid step of the online logsumexp."""
    bi = pl.program_id(0)           # batch tile index  ("parallel")
    ci = pl.program_id(1)           # class tile index  ("arbitrary", reduction)
    nc = pl.num_programs(1)

    # Single VMEM read of the tile; all math in f32 vregs.
    x = x_ref[...].astype(jnp.float32)          # (bb, bc)

    if C % bc != 0:
        # Mask out-of-range class columns of the last (padded) class tile.
        # exp(-inf - m) == 0, so they contribute nothing to the running sum.
        col = jax.lax.broadcasted_iota(jnp.int32, x.shape, 1) + ci * bc
        x = jnp.where(col < C, x, -jnp.inf)

    @pl.when(ci == 0)
    def _init():
        m_ref[...] = jnp.full_like(m_ref, -jnp.inf)
        l_ref[...] = jnp.zeros_like(l_ref)
        # label == 0 for every row -> the target logit lives only in the
        # first class tile; grab it from the already-loaded tile.
        t_ref[...] = x[:, 0:1]

    # Online (flash-style) logsumexp along the class axis.
    m_prev = m_ref[...]
    m_new = jnp.maximum(m_prev, jnp.max(x, axis=-1, keepdims=True))
    alpha = jnp.exp(m_prev - m_new)             # exp(-inf) = 0 on first tile
    l_ref[...] = alpha * l_ref[...] + jnp.sum(jnp.exp(x - m_new),
                                              axis=-1, keepdims=True)
    m_ref[...] = m_new

    @pl.when(ci == nc - 1)
    def _finalize():
        lse = jnp.log(l_ref[...]) + m_ref[...]   # (bb, 1)
        per_row = lse - t_ref[...]               # (bb, 1)
        if B % bb != 0:
            # Mask padded rows of the last (padded) batch tile.
            row = jax.lax.broadcasted_iota(jnp.int32, per_row.shape, 0) + bi * bb
            per_row = jnp.where(row < B, per_row, 0.0)
        tile_sum = jnp.sum(per_row)
        # Lane-dense (8, 128) store -> unmasked full-width vst; the wrapper
        # reads a single element per batch tile.
        o_ref[...] = jnp.full(o_ref.shape, tile_sum, dtype=jnp.float32)


def _sublane_multiple(itemsize):
    """Sublane packing multiple for the dtype (f32: 8, bf16: 16, 8-bit: 32)."""
    return 8 * max(1, 4 // max(1, itemsize))


def _choose_tiles(B, C, itemsize):
    """Pick (batch_tile, class_tile) so one input buffer stays <= ~8 MiB.

    Double-buffered that is <= ~16 MiB, comfortably inside the 32 MiB scoped
    VMEM limit requested below on every generation (v5e/v6e: 128 MiB physical,
    v7x: 64 MiB).
    """
    max_bc = 8192                                # multiple of 128
    bc = C if C <= max_bc else max_bc

    budget_bytes = 8 * 1024 * 1024               # per input buffer
    bb = budget_bytes // max(1, bc * itemsize)
    bb = min(bb, 1024)                           # 512-1024 rows ~ HBM roofline

    sub = _sublane_multiple(itemsize)
    if bb >= B:
        bb = B                                   # full dim: no divisibility req
    else:
        bb = max(sub, (bb // sub) * sub)
    return bb, bc


def nce_softmax_loss(x, *, block_b=None, block_c=None):
    """x: [B, C] logits (f32 / bf16 / ...). Returns scalar f32 loss."""
    B, C = x.shape
    itemsize = jnp.dtype(x.dtype).itemsize
    sub = _sublane_multiple(itemsize)

    auto_bb, auto_bc = _choose_tiles(B, C, itemsize)
    bb = auto_bb if block_b is None else min(block_b, B)
    bc = auto_bc if block_c is None else min(block_c, C)
    if bb < B:
        bb = max(sub, (bb // sub) * sub)         # keep dtype sublane packing
    if bc < C:
        bc = max(_LANE, (bc // _LANE) * _LANE)   # keep lane-dense class tiles

    nb = pl.cdiv(B, bb)
    nc = pl.cdiv(C, bc)

    kernel = functools.partial(_nce_kernel, B=B, C=C, bb=bb, bc=bc)

    cost = pl.CostEstimate(
        flops=3 * B * C,                          # max, subtract, sum
        transcendentals=B * C,                    # exp
        bytes_accessed=B * C * itemsize + nb * 8 * _LANE * 4,
    )

    partial_sums = pl.pallas_call(
        kernel,
        out_shape=jax.ShapeDtypeStruct((nb, 8, _LANE), jnp.float32),
        grid_spec=pltpu.PrefetchScalarGridSpec(
            num_scalar_prefetch=0,
            grid=(nb, nc),
            in_specs=[pl.BlockSpec((bb, bc), lambda i, j: (i, j))],
            out_specs=pl.BlockSpec((1, 8, _LANE), lambda i, j: (i, 0, 0)),
            scratch_shapes=[
                pltpu.VMEM((bb, 1), jnp.float32),   # running max  m
                pltpu.VMEM((bb, 1), jnp.float32),   # running sum  l
                pltpu.VMEM((bb, 1), jnp.float32),   # class-0 target logit
            ],
        ),
        compiler_params=pltpu.CompilerParams(
            dimension_semantics=("parallel", "arbitrary"),
            vmem_limit_bytes=32 * 1024 * 1024,
        ),
        cost_estimate=cost,
    )(x)

    return jnp.sum(partial_sums[:, 0, 0]) / jnp.float32(B)


def nce_softmax_loss_module(x):
    """Mirrors NCESoftmaxLoss.forward: accepts a tensor or a dict of tensors."""
    if isinstance(x, dict):
        # TODO(synk): the PyTorch dict branch passes `x` (the dict) to the
        # criterion, which would error; here we apply the loss to each value
        # and sum, which is the most plausible intended semantics.
        loss = jnp.float32(0.0)
        for _, v in x.items():
            loss = loss + nce_softmax_loss(v)
        return loss
    return nce_softmax_loss(x)


if __name__ == "__main__":
    key = jax.random.PRNGKey(0)

    # 1) Small canonical case matching the module's [B, C] logits convention.
    B, C = 8, 32
    x = jax.random.normal(key, (B, C), dtype=jnp.float32)
    loss = nce_softmax_loss_module(x)
    jax.block_until_ready(loss)
    xf = x.astype(jnp.float32)
    ref = jnp.mean(jax.nn.logsumexp(xf, axis=-1) - xf[:, 0])
    assert jnp.allclose(loss, ref, atol=1e-5, rtol=1e-5)

    # 2) Exercise the tiled path: bf16 input, B not a multiple of block_b,
    #    C not a multiple of block_c (row + column masking, online LSE).
    B2, C2 = 40, 300
    x2 = jax.random.normal(jax.random.PRNGKey(0), (B2, C2),
                           dtype=jnp.float32).astype(jnp.bfloat16)
    loss2 = nce_softmax_loss(x2, block_b=16, block_c=128)
    jax.block_until_ready(loss2)
    x2f = x2.astype(jnp.float32)
    ref2 = jnp.mean(jax.nn.logsumexp(x2f, axis=-1) - x2f[:, 0])
    assert jnp.allclose(loss2, ref2, atol=1e-4, rtol=1e-4)

    # 3) Dict input branch of the module.
    loss3 = nce_softmax_loss_module({"a": x, "b": x})
    jax.block_until_ready(loss3)
    assert jnp.allclose(loss3, 2.0 * ref, atol=1e-5, rtol=1e-5)

    print("KERNEL_OK")
</pallas_src>

<mosaic_0001>
module attributes {stable_mosaic.version = 11 : i64} {
  func.func @_nce_kernel(%arg0: i32, %arg1: i32, %arg2: memref<8x32xf32, #tpu.memory_space<vmem>>, %arg3: memref<1x8x128xf32, #tpu.memory_space<vmem>>, %arg4: memref<8x1xf32, #tpu.memory_space<vmem>>, %arg5: memref<8x1xf32, #tpu.memory_space<vmem>>, %arg6: memref<8x1xf32, #tpu.memory_space<vmem>>) attributes {dimension_semantics = [#tpu.dimension_semantics<parallel>, #tpu.dimension_semantics<arbitrary>], iteration_bounds = array<i64: 1, 1>, scalar_prefetch = 0 : i64, scratch_operands = 3 : i64, tpu.core_type = #tpu.core_type<tc>, window_params = [{transform_indices = @transform_0, window_bounds = array<i64: 8, 32>}, {transform_indices = @transform_1, window_bounds = array<i64: 1, 8, 128>}]} {
    %c0 = arith.constant 0 : index
    %c0_0 = arith.constant 0 : index
    %0 = vector.load %arg2[%c0, %c0_0] : memref<8x32xf32, #tpu.memory_space<vmem>>, vector<8x32xf32>
    %c0_i32 = arith.constant 0 : i32
    %1 = arith.cmpi eq, %arg1, %c0_i32 : i32
    %2 = arith.extui %1 : i1 to i32
    %c0_i32_1 = arith.constant 0 : i32
    %3 = arith.cmpi ne, %2, %c0_i32_1 : i32
    scf.if %3 {
      %cst_13 = arith.constant 0xFF800000 : f32
      %23 = vector.broadcast %cst_13 : f32 to vector<8x1xf32>
      %c0_14 = arith.constant 0 : index
      %c0_15 = arith.constant 0 : index
      %24 = vector.load %arg4[%c0_14, %c0_15] : memref<8x1xf32, #tpu.memory_space<vmem>>, vector<8x1xf32>
      tpu.vector_store %arg4[%c0_14, %c0_15], %23 {strides = array<i32>} : memref<8x1xf32, #tpu.memory_space<vmem>>, vector<8x1xf32>,
      %cst_16 = arith.constant 0.000000e+00 : f32
      %25 = vector.broadcast %cst_16 : f32 to vector<8x1xf32>
      %c0_17 = arith.constant 0 : index
      %c0_18 = arith.constant 0 : index
      %26 = vector.load %arg5[%c0_17, %c0_18] : memref<8x1xf32, #tpu.memory_space<vmem>>, vector<8x1xf32>
      tpu.vector_store %arg5[%c0_17, %c0_18], %25 {strides = array<i32>} : memref<8x1xf32, #tpu.memory_space<vmem>>, vector<8x1xf32>,
      %27 = vector.extract_strided_slice %0 {offsets = [0, 0], sizes = [8, 1], strides = [1, 1]} : vector<8x32xf32> to vector<8x1xf32>
      %c0_19 = arith.constant 0 : index
      %c0_20 = arith.constant 0 : index
      %28 = vector.load %arg6[%c0_19, %c0_20] : memref<8x1xf32, #tpu.memory_space<vmem>>, vector<8x1xf32>
      tpu.vector_store %arg6[%c0_19, %c0_20], %27 {strides = array<i32>} : memref<8x1xf32, #tpu.memory_space<vmem>>, vector<8x1xf32>,
    } else {
    }
    %c0_2 = arith.constant 0 : index
    %c0_3 = arith.constant 0 : index
    %4 = vector.load %arg4[%c0_2, %c0_3] : memref<8x1xf32, #tpu.memory_space<vmem>>, vector<8x1xf32>
    %cst = arith.constant dense<0xFF800000> : vector<8xf32>
    %5 = vector.multi_reduction <maximumf>, %0, %cst [1] : vector<8x32xf32> to vector<8xf32>
    %6 = vector.shape_cast %5 : vector<8xf32> to vector<8x1xf32>
    %7 = arith.maximumf %4, %6 : vector<8x1xf32>
    %8 = arith.subf %4, %7 : vector<8x1xf32>
    %9 = math.exp %8 : vector<8x1xf32>
    %c0_4 = arith.constant 0 : index
    %c0_5 = arith.constant 0 : index
    %10 = vector.load %arg5[%c0_4, %c0_5] : memref<8x1xf32, #tpu.memory_space<vmem>>, vector<8x1xf32>
    %11 = arith.mulf %9, %10 : vector<8x1xf32>
    %12 = vector.broadcast %7 : vector<8x1xf32> to vector<8x32xf32>
    %13 = arith.subf %0, %12 : vector<8x32xf32>
    %14 = math.exp %13 : vector<8x32xf32>
    %cst_6 = arith.constant dense<0.000000e+00> : vector<8xf32>
    %15 = vector.multi_reduction <add>, %14, %cst_6 [1] : vector<8x32xf32> to vector<8xf32>
    %16 = vector.shape_cast %15 : vector<8xf32> to vector<8x1xf32>
    %17 = arith.addf %11, %16 : vector<8x1xf32>
    %c0_7 = arith.constant 0 : index
    %c0_8 = arith.constant 0 : index
    %18 = vector.load %arg5[%c0_7, %c0_8] : memref<8x1xf32, #tpu.memory_space<vmem>>, vector<8x1xf32>
    tpu.vector_store %arg5[%c0_7, %c0_8], %17 {strides = array<i32>} : memref<8x1xf32, #tpu.memory_space<vmem>>, vector<8x1xf32>,
    %c0_9 = arith.constant 0 : index
    %c0_10 = arith.constant 0 : index
    %19 = vector.load %arg4[%c0_9, %c0_10] : memref<8x1xf32, #tpu.memory_space<vmem>>, vector<8x1xf32>
    tpu.vector_store %arg4[%c0_9, %c0_10], %7 {strides = array<i32>} : memref<8x1xf32, #tpu.memory_space<vmem>>, vector<8x1xf32>,
    %c0_i32_11 = arith.constant 0 : i32
    %20 = arith.cmpi eq, %arg1, %c0_i32_11 : i32
    %21 = arith.extui %20 : i1 to i32
    %c0_i32_12 = arith.constant 0 : i32
    %22 = arith.cmpi ne, %21, %c0_i32_12 : i32
    scf.if %22 {
      %c0_13 = arith.constant 0 : index
      %c0_14 = arith.constant 0 : index
      %23 = vector.load %arg5[%c0_13, %c0_14] : memref<8x1xf32, #tpu.memory_space<vmem>>, vector<8x1xf32>
      %24 = math.log %23 : vector<8x1xf32>
      %c0_15 = arith.constant 0 : index
      %c0_16 = arith.constant 0 : index
      %25 = vector.load %arg4[%c0_15, %c0_16] : memref<8x1xf32, #tpu.memory_space<vmem>>, vector<8x1xf32>
      %26 = arith.addf %24, %25 : vector<8x1xf32>
      %c0_17 = arith.constant 0 : index
      %c0_18 = arith.constant 0 : index
      %27 = vector.load %arg6[%c0_17, %c0_18] : memref<8x1xf32, #tpu.memory_space<vmem>>, vector<8x1xf32>
      %28 = arith.subf %26, %27 : vector<8x1xf32>
      %29 = vector.shape_cast %28 : vector<8x1xf32> to vector<1x8x1xf32>
      %cst_19 = arith.constant dense<0.000000e+00> : vector<1xf32>
      %30 = vector.multi_reduction <add>, %29, %cst_19 [1, 2] : vector<1x8x1xf32> to vector<1xf32>
      %31 = vector.shape_cast %30 : vector<1xf32> to vector<1x1x1xf32>
      %32 = vector.extract %31[0, 0, 0] : f32 from vector<1x1x1xf32>
      %33 = vector.broadcast %32 : f32 to vector<1x8x128xf32>
      %c0_20 = arith.constant 0 : index
      %c0_21 = arith.constant 0 : index
      %c0_22 = arith.constant 0 : index
      %34 = vector.load %arg3[%c0_20, %c0_21, %c0_22] : memref<1x8x128xf32, #tpu.memory_space<vmem>>, vector<1x8x128xf32>
      tpu.vector_store %arg3[%c0_20, %c0_21, %c0_22], %33 {strides = array<i32>} : memref<1x8x128xf32, #tpu.memory_space<vmem>>, vector<1x8x128xf32>,
    } else {
    }
    return
  }
  func.func @transform_0(%arg0: i32, %arg1: i32) -> (i32, i32) {
    %c0_i32 = arith.constant 0 : i32
    return %arg0, %arg1 : i32, i32
  }
  func.func @transform_1(%arg0: i32, %arg1: i32) -> (i32, i32, i32) {
    %c0_i32 = arith.constant 0 : i32
    %c0_i32_0 = arith.constant 0 : i32
    %c0_i32_1 = arith.constant 0 : i32
    return %arg0, %c0_i32, %c0_i32_0 : i32, i32, i32
  }
}

</mosaic_0001>

<llo_original>
// kernel: tpu_custom_call.1
$region0: #{tpu_custom_call.1}
  #allocation0 [shape = 'u32[]', space=smem, size = 0x4, offset = 0x4, fixed_abs, tag = 'smem constant byte address 0x4 - core index']
  #allocation1 [shape = 'u32[144,128]{1,0:T(1,128)}', space=vmem, size = 0x12000, scoped, tag = 'internal scratch']
  #allocation2 [shape = 'f32[8,1]{1,0:T(8,128)}', space=vmem, size = 0x1000, scoped, tag = 'scratch operand']
  #allocation3 [shape = 'f32[8,1]{1,0:T(8,128)}', space=vmem, size = 0x1000, scoped, tag = 'scratch operand']
  #allocation4 [shape = 'f32[8,1]{1,0:T(8,128)}', space=vmem, size = 0x1000, scoped, tag = 'scratch operand']
  %s0 = inlined_call_operand.hbm [shape: f32[8,32], index: 0, kind: input, shape index: {}]
  %s1 = inlined_call_operand.hbm [shape: f32[1,8,128], index: 1, kind: output, shape index: {}]
  %s2 = sld [smem:[#allocation0]]
  $region26: #{tpu_custom_call.1} parent=0
    _
  %s4 = ssub.s32 1, %s2
  %s5 = scalar_select 0, %s4, %s2
  $region1: #{tpu_custom_call.1} parent=0
    #allocation5 [shape = 'u8[4096]{0}', space=vmem, size = 0x1000, scoped, tag = 'input window, operand 0, single buffered']
    #allocation6 [shape = 's32[1]{0}', space=sflag, size = 0x4, scoped, tag = 'scoped memory for tpu_custom_call.1']
    #allocation7 [shape = 's32[1]{0}', space=sflag, size = 0x4, scoped, tag = 'scoped memory for tpu_custom_call.1']
    #allocation8 [shape = 'u8[4096]{0}', space=vmem, size = 0x1000, scoped, tag = 'output window, operand 0, single buffered']
    %6 = vsyncpa [#allocation6], 0
    %7 = vsyncpa [#allocation7], 0
    // Predicated region
    $region2: #{tpu_custom_call.1} parent=1 // pred_check
      _
    $region3: #{tpu_custom_call.1} parent=1 // pred_check_branch
      %9 = sbr.rel (0) target = $region5
    $region4: #{tpu_custom_call.1} parent=1 // pred_region
      %s11 = ssub.s32 128, 128
      %12 = vsyncadd [#allocation6], %s11
      %s14 = sshll.u32 [#allocation5], 4
      %s15 = int_to_ptr.vmem [resolvable:$true] %s14
      %17 = dma.hbm_to_vmem [thread:$0]  %s0, 128, %s15, [#allocation6]
    $region5: #{tpu_custom_call.1} parent=1 // pred_fallthru
      _
    // Predicated region
    $region6: #{tpu_custom_call.1} parent=1 // pred_check
      _
    $region7: #{tpu_custom_call.1} parent=1 // pred_check_branch
      %19 = sbr.rel (0) target = $region9
    $region8: #{tpu_custom_call.1} parent=1 // pred_region
      %20 = dma.done [#allocation6], 128
    $region9: #{tpu_custom_call.1} parent=1 // pred_fallthru
      _
    %v21 = vld [vmem:[#allocation5] sm:$0xff]
    %p22 = scmp.eq.s32.totalorder 0, 0
    // Predicated region
    $region10: #{tpu_custom_call.1} parent=1 // pred_check
      %p23 = pneg %p22
    $region11: #{tpu_custom_call.1} parent=1 // pred_check_branch
      %25 = sbr.rel (%p23) target = $region13
    $region12: #{tpu_custom_call.1} parent=1 // pred_region
      %vm26 = vcmask 7168
      %27 = vst.msk [vmem:[#allocation2] sm:$0xff] %vm26, -inf
      %28 = vst.msk [vmem:[#allocation3] sm:$0xff] %vm26, 0.0
      %29 = vst.msk [vmem:[#allocation4] sm:$0xff] %vm26, %v21
    $region13: #{tpu_custom_call.1} parent=1 // pred_fallthru
      _
    %v30 = vld [vmem:[#allocation2] sm:$0xff]
    %vm31 = vcmask 261120
    %v32 = vsel %vm31, %v21, -inf
    %33 = vmax.xlane.f32.xlu0 %v32
    %v34 = vpop.xlane.xlu0 %33
    %v35 = vmax.f32 %v30, %v34
    %v36 = vsub.f32 %v30, %v35
    %v37 = vmul.f32 %v36, 1.442695
    %v38 = vpow.pop %v37
    %v39 = vld [vmem:[#allocation3] sm:$0xff]
    %v40 = vmul.f32 %v38, %v39
    %42 = vset.pattern.permute.xlu0 0
    %43 = vperm.xlu0 %42, %v35
    %v44 = vpop.permute.xlu0 %43
    %v46 = vsub.f32 %v21, %v44
    %v47 = vmul.f32 %v46, 1.442695
    %v48 = vpow.pop %v47
    %v49 = vsel %vm31, %v48, 0.0
    %50 = vadd.xlane.f32.xlu0 %v49
    %v51 = vpop.xlane.xlu0 %50
    %v52 = vadd.f32 %v40, %v51
    %vm53 = vcmask 7168
    %54 = vst.msk [vmem:[#allocation3] sm:$0xff] %vm53, %v52
    %55 = vst.msk [vmem:[#allocation2] sm:$0xff] %vm53, %v35
    // Predicated region
    $region14: #{tpu_custom_call.1} parent=1 // pred_check
      %p56 = pneg %p22
    $region15: #{tpu_custom_call.1} parent=1 // pred_check_branch
      %58 = sbr.rel (%p56) target = $region17
    $region16: #{tpu_custom_call.1} parent=1 // pred_region
      %v59 = vld [vmem:[#allocation3] sm:$0xff]
      %v60 = vlog2.pop %v59
      %v61 = vmul.f32 %v60, 0.6931472
      %v62 = vld [vmem:[#allocation2] sm:$0xff]
      %v63 = vadd.f32 %v61, %v62
      %v64 = vld [vmem:[#allocation4] sm:$0xff]
      %v65 = vsub.f32 %v63, %v64
      %v66 = vsel %vm53, %v65, 0.0
      %67 = vadd.xlane.f32.xlu0 %v66
      %v68 = vpop.xlane.xlu0 %67
      %v69 = vrot.slane %v68, 4
      %v70 = vadd.f32 %v68, %v69
      %v71 = vrot.slane %v70, 2
      %v72 = vadd.f32 %v70, %v71
      %v73 = vrot.slane %v72, 1
      %v74 = vadd.f32 %v72, %v73
      %s75 = vtos %v74
      %v76 = vstv %s75
      %77 = vst [vmem:[#allocation8] sm:$0xff] %v76
    $region17: #{tpu_custom_call.1} parent=1 // pred_fallthru
      _
    // Predicated region
    $region18: #{tpu_custom_call.1} parent=1 // pred_check
      _
    $region19: #{tpu_custom_call.1} parent=1 // pred_check_branch
      %79 = sbr.rel (0) target = $region21
    $region20: #{tpu_custom_call.1} parent=1 // pred_region
      %s81 = ssub.s32 128, 128
      %82 = vsyncadd [#allocation7], %s81
      %s84 = sshll.u32 [#allocation8], 4
      %s85 = int_to_ptr.vmem [resolvable:$true] %s84
      %87 = dma.vmem_to_hbm [thread:$0]  %s85, 128, %s1, [#allocation7]
    $region21: #{tpu_custom_call.1} parent=1 // pred_fallthru
      _
    // Predicated region
    $region22: #{tpu_custom_call.1} parent=1 // pred_check
      _
    $region23: #{tpu_custom_call.1} parent=1 // pred_check_branch
      %89 = sbr.rel (0) target = $region25
    $region24: #{tpu_custom_call.1} parent=1 // pred_region
      %90 = dma.done [#allocation7], 128
    $region25: #{tpu_custom_call.1} parent=1 // pred_fallthru
      _
    %91 = vsyncpa [#allocation6], 1
    %92 = vsyncpa [#allocation7], 1

</llo_original>
